<compile_context>
chip_gen: v6e
topology: v6e:2x2x1
jax: 0.10.0
libtpu: 0.0.40
codegen_flags: <defaults>
</compile_context>

<pallas_src>
import jax
import jax.numpy as jnp
from jax.experimental import pallas as pl
from jax.experimental.pallas import tpu as pltpu


def _round_up(x, m):
    return ((x + m - 1) // m) * m


def _vmem_capacity_bytes():
    try:
        return int(pltpu.get_tpu_info().vmem_capacity_bytes)
    except Exception:
        return 64 * 1024 * 1024  # conservative default (v7x per-TC VMEM)


def _shrink_tile(t):
    """Largest multiple of 128 that is <= t//2 (floor 128)."""
    return max(128, ((t // 2) // 128) * 128)


# --------------------------------------------------------------------------- #
# Kernel factories (compute_dtype=None -> use operand dtype; jnp.bfloat16 ->
# cast operands in-kernel, accumulate in f32 on the MXU).
# --------------------------------------------------------------------------- #
def _make_single_kernel(compute_dtype):
    def kernel(a_ref, b_ref, o_ref):
        a = a_ref[...]
        b = b_ref[...]
        if compute_dtype is not None:
            a = a.astype(compute_dtype)
            b = b.astype(compute_dtype)
        o_ref[...] = jnp.dot(a, b, preferred_element_type=jnp.float32).astype(o_ref.dtype)

    return kernel


def _make_accum_out_kernel(compute_dtype):
    # f32 output: accumulate directly into the resident output tile.
    def kernel(a_ref, b_ref, o_ref):
        @pl.when(pl.program_id(2) == 0)
        def _():
            o_ref[...] = jnp.zeros_like(o_ref)

        a = a_ref[...]
        b = b_ref[...]
        if compute_dtype is not None:
            a = a.astype(compute_dtype)
            b = b.astype(compute_dtype)
        o_ref[...] += jnp.dot(a, b, preferred_element_type=jnp.float32)

    return kernel


def _make_scratch_kernel(compute_dtype):
    # narrow output dtype: f32 scratch accumulator, cast on last K step.
    def kernel(a_ref, b_ref, o_ref, acc_ref):
        @pl.when(pl.program_id(2) == 0)
        def _():
            acc_ref[...] = jnp.zeros_like(acc_ref)

        a = a_ref[...]
        b = b_ref[...]
        if compute_dtype is not None:
            a = a.astype(compute_dtype)
            b = b.astype(compute_dtype)
        acc_ref[...] += jnp.dot(a, b, preferred_element_type=jnp.float32)

        @pl.when(pl.program_id(2) == pl.num_programs(2) - 1)
        def _():
            o_ref[...] = acc_ref[...].astype(o_ref.dtype)

    return kernel


# --------------------------------------------------------------------------- #
# Tile selection: minimize real HBM traffic subject to a VMEM footprint budget.
# --------------------------------------------------------------------------- #
def _select_tiles(M, K, N, a_item, b_item, out_item, need_acc, budget):
    Mp128, Kp128, Np128 = _round_up(M, 128), _round_up(K, 128), _round_up(N, 128)

    tm_cands = sorted({min(c, Mp128) for c in (1024, 512, 384, 256, 128)})
    tn_cands = sorted({min(c, Np128) for c in (2048, 1024, 512, 384, 256, 128)})
    tk_cands = sorted({min(c, Kp128) for c in (2048, 1024, 512, 256, 128)}, reverse=True)

    best_key, best_tiles = None, (128, 128, 128)
    for tk in tk_cands:
        Kp = _round_up(K, tk)
        for tm in tm_cands:
            Mp = _round_up(M, tm)
            for tn in tn_cands:
                Np = _round_up(N, tn)
                # double-buffered A/B/output (+ f32 accumulator if needed)
                fp = 2 * (tm * tk * a_item + tk * tn * b_item + tm * tn * out_item)
                if need_acc:
                    fp += tm * tn * 4
                if fp > budget:
                    continue
                # real HBM traffic: A re-read per N-block, B re-read per M-block,
                # output written once (padding waste included via Mp/Kp/Np).
                traffic = (Mp * Kp * a_item * (Np // tn)
                           + Kp * Np * b_item * (Mp // tm)
                           + Mp * Np * out_item)
                key = (traffic, Kp // tk, -tn, -tm)
                if best_key is None or key < best_key:
                    best_key, best_tiles = key, (tm, tn, tk)
    return best_tiles


# --------------------------------------------------------------------------- #
# Public wrapper: np.dot(x1, x2) for 2-D inputs on the MXU.
# --------------------------------------------------------------------------- #
def pallas_matmul(x1, x2, *, force_tiled=False, allow_bf16=False):
    M, K = x1.shape
    K2, N = x2.shape
    assert K == K2, "inner dimensions must match"

    if not (jnp.issubdtype(x1.dtype, jnp.floating)
            and jnp.issubdtype(x2.dtype, jnp.floating)):
        # TODO(synk): exact integer accumulation (np.dot int semantics) has no MXU
        # path on v7x; fall back to XLA for non-float dtypes.
        return jnp.dot(x1, x2)

    out_dtype = jnp.result_type(x1.dtype, x2.dtype)
    a_item = x1.dtype.itemsize
    b_item = x2.dtype.itemsize
    out_item = jnp.dtype(out_dtype).itemsize

    compute_dtype = None
    if allow_bf16 and x1.dtype == jnp.float32 and x2.dtype == jnp.float32:
        compute_dtype = jnp.bfloat16  # bf16 operands, f32 accumulation

    cap = _vmem_capacity_bytes()
    fast_thresh = min(16 * 1024 * 1024, cap // 4)
    total_bytes = M * K * a_item + K * N * b_item + M * N * out_item

    # ---- fast path: one invocation, full-extent blocks, no grid overhead ----
    if not force_tiled and total_bytes <= fast_thresh:
        cost = pl.CostEstimate(flops=2 * M * N * K, transcendentals=0,
                               bytes_accessed=total_bytes)
        return pl.pallas_call(
            _make_single_kernel(compute_dtype),
            out_shape=jax.ShapeDtypeStruct((M, N), out_dtype),
            compiler_params=pltpu.CompilerParams(
                vmem_limit_bytes=min(int(cap * 0.6), 64 * 1024 * 1024)),
            cost_estimate=cost,
        )(x1, x2)

    # ---- tiled path ----------------------------------------------------------
    vmem_limit = int(cap * 0.8)          # ~102 MiB on v5e/v6e, ~51 MiB on v7x
    tile_budget = int(vmem_limit * 0.9)  # headroom for Mosaic internal scratch
    need_acc = out_dtype != jnp.float32

    tm, tn, tk = _select_tiles(M, K, N, a_item, b_item, out_item, need_acc, tile_budget)

    # Megacore (v7x has 2 TensorCores): keep >= 2 blocks along a parallel axis.
    if (_round_up(M, tm) // tm) * (_round_up(N, tn) // tn) < 2:
        if M > 128 and _shrink_tile(tm) < tm:
            tm = _shrink_tile(tm)          # split M; keeps output lane-dense
        elif N > 128 and _shrink_tile(tn) < tn:
            tn = _shrink_tile(tn)

    Mp, Kp, Np = _round_up(M, tm), _round_up(K, tk), _round_up(N, tn)
    # Pad only when strictly required (K-padding with zeros is numerically exact;
    # tile selection keeps M/N padding < 128 rows/cols in the common case).
    a = x1 if (Mp == M and Kp == K) else jnp.pad(x1, ((0, Mp - M), (0, Kp - K)))
    b = x2 if (Kp == K and Np == N) else jnp.pad(x2, ((0, Kp - K), (0, Np - N)))

    grid = (Mp // tm, Np // tn, Kp // tk)

    bytes_accessed = (Mp * Kp * a_item * grid[1]
                      + Kp * Np * b_item * grid[0]
                      + Mp * Np * out_item)
    cost = pl.CostEstimate(flops=2 * M * N * K, transcendentals=0,
                           bytes_accessed=bytes_accessed)

    if need_acc:
        kernel = _make_scratch_kernel(compute_dtype)
        scratch_shapes = [pltpu.VMEM((tm, tn), jnp.float32)]
    else:
        kernel = _make_accum_out_kernel(compute_dtype)
        scratch_shapes = []

    out = pl.pallas_call(
        kernel,
        out_shape=jax.ShapeDtypeStruct((Mp, Np), out_dtype),
        grid_spec=pltpu.PrefetchScalarGridSpec(
            num_scalar_prefetch=0,
            grid=grid,
            in_specs=[
                pl.BlockSpec((tm, tk), lambda i, j, k: (i, k)),
                pl.BlockSpec((tk, tn), lambda i, j, k: (k, j)),
            ],
            out_specs=pl.BlockSpec((tm, tn), lambda i, j, k: (i, j)),
            scratch_shapes=scratch_shapes,
        ),
        compiler_params=pltpu.CompilerParams(
            dimension_semantics=("parallel", "parallel", "arbitrary"),
            vmem_limit_bytes=vmem_limit,
        ),
        cost_estimate=cost,
    )(a, b)

    if Mp != M or Np != N:
        out = out[:M, :N]
    return out


if __name__ == "__main__":
    key = jax.random.PRNGKey(0)
    k1, k2, k3, k4 = jax.random.split(key, 4)

    # Small shapes consistent with an attention-score matmul: (seq, hidden) @ (hidden, seq')
    M, K, N = 16, 64, 128
    x1 = jax.random.normal(k1, (M, K), dtype=jnp.float32)
    x2 = jax.random.normal(k2, (K, N), dtype=jnp.float32)

    out = pallas_matmul(x1, x2)            # single-block fast path
    jax.block_until_ready(out)
    ref = jnp.dot(x1, x2)
    assert out.shape == (M, N)
    assert jnp.allclose(out, ref, atol=1e-4, rtol=1e-4)

    # Exercise the tiled (padded) path on a small, non-tile-multiple shape.
    M2, K2, N2 = 200, 384, 260
    y1 = jax.random.normal(k3, (M2, K2), dtype=jnp.float32)
    y2 = jax.random.normal(k4, (K2, N2), dtype=jnp.float32)

    out2 = pallas_matmul(y1, y2, force_tiled=True)
    jax.block_until_ready(out2)
    ref2 = jnp.dot(y1, y2)
    assert out2.shape == (M2, N2)
    assert jnp.allclose(out2, ref2, atol=1e-3, rtol=1e-3)

    # Optional bf16-operand path (f32 accumulation) for MXU peak on v6e/v7x.
    out3 = pallas_matmul(y1, y2, force_tiled=True, allow_bf16=True)
    jax.block_until_ready(out3)
    ref3 = jnp.dot(y1.astype(jnp.bfloat16), y2.astype(jnp.bfloat16),
                   preferred_element_type=jnp.float32)
    assert jnp.allclose(out3, ref3, atol=5e-2, rtol=5e-2)

    print("KERNEL_OK")
</pallas_src>

<mosaic_0001>
module attributes {stable_mosaic.version = 11 : i64} {
  func.func @kernel(%arg0: memref<16x64xf32, #tpu.memory_space<vmem>>, %arg1: memref<64x128xf32, #tpu.memory_space<vmem>>, %arg2: memref<16x128xf32, #tpu.memory_space<vmem>>) attributes {dimension_semantics = [], scalar_prefetch = 0 : i64, scratch_operands = 0 : i64, tpu.core_type = #tpu.core_type<tc>} {
    %c0 = arith.constant 0 : index
    %c0_0 = arith.constant 0 : index
    %0 = vector.load %arg0[%c0, %c0_0] : memref<16x64xf32, #tpu.memory_space<vmem>>, vector<16x64xf32>
    %c0_1 = arith.constant 0 : index
    %c0_2 = arith.constant 0 : index
    %1 = vector.load %arg1[%c0_1, %c0_2] : memref<64x128xf32, #tpu.memory_space<vmem>>, vector<64x128xf32>
    %cst = arith.constant dense<0.000000e+00> : vector<16x128xf32>
    %2 = tpu.matmul %0, %1, %cst {dimension_numbers = #tpu.dot_dimension_numbers<[1], [0], [0], [1], [0, 0, 1, 1], [], []>} : vector<16x64xf32>, vector<64x128xf32>, vector<16x128xf32> -> vector<16x128xf32>
    %c0_3 = arith.constant 0 : index
    %c0_4 = arith.constant 0 : index
    %3 = vector.load %arg2[%c0_3, %c0_4] : memref<16x128xf32, #tpu.memory_space<vmem>>, vector<16x128xf32>
    tpu.vector_store %arg2[%c0_3, %c0_4], %2 {strides = array<i32>} : memref<16x128xf32, #tpu.memory_space<vmem>>, vector<16x128xf32>,
    return
  }
}

</mosaic_0001>

<llo_original>
// kernel: tpu_custom_call.1
$region0: #{tpu_custom_call.1}
  #allocation0 [shape = 'u32[]', space=smem, size = 0x4, offset = 0x4, fixed_abs, tag = 'smem constant byte address 0x4 - core index']
  #allocation1 [shape = 'u32[144,128]{1,0:T(1,128)}', space=vmem, size = 0x12000, scoped, tag = 'internal scratch']
  %s0 = inlined_call_operand.hbm [shape: f32[16,64], index: 0, kind: input, shape index: {}]
  %s1 = inlined_call_operand.hbm [shape: f32[64,128], index: 1, kind: input, shape index: {}]
  %s2 = inlined_call_operand.hbm [shape: f32[16,128], index: 2, kind: output, shape index: {}]
  %s3 = sld [smem:[#allocation0]]
  $region26: #{tpu_custom_call.1} parent=0
    _
  %s5 = ssub.s32 1, %s3
  %s6 = scalar_select 0, %s5, %s3
  $region1: #{tpu_custom_call.1} parent=0
    #allocation2 [shape = 'u8[8192]{0}', space=vmem, size = 0x2000, scoped, tag = 'input window, operand 0, single buffered']
    #allocation3 [shape = 's32[1]{0}', space=sflag, size = 0x4, scoped, tag = 'scoped memory for tpu_custom_call.1']
    #allocation4 [shape = 's32[1]{0}', space=sflag, size = 0x4, scoped, tag = 'scoped memory for tpu_custom_call.1']
    #allocation5 [shape = 'u8[32768]{0}', space=vmem, size = 0x8000, scoped, tag = 'input window, operand 1, single buffered']
    #allocation6 [shape = 's32[1]{0}', space=sflag, size = 0x4, scoped, tag = 'scoped memory for tpu_custom_call.1']
    #allocation7 [shape = 'u8[8192]{0}', space=vmem, size = 0x2000, scoped, tag = 'output window, operand 0, single buffered']
    %7 = vsyncpa [#allocation3], 0
    %8 = vsyncpa [#allocation6], 0
    %9 = vsyncpa [#allocation4], 0
    // Predicated region
    $region2: #{tpu_custom_call.1} parent=1 // pred_check
      _
    $region3: #{tpu_custom_call.1} parent=1 // pred_check_branch
      %11 = sbr.rel (0) target = $region5
    $region4: #{tpu_custom_call.1} parent=1 // pred_region
      %s13 = ssub.s32 256, 256
      %14 = vsyncadd [#allocation3], %s13
      %s15 = sshll.u32 [#allocation2], 4
      %s16 = int_to_ptr.vmem [resolvable:$true] %s15
      %21 = dma.hbm_to_vmem [thread:$0]  %s0, 256, %s16, [#allocation3], 128, 128, 8
    $region5: #{tpu_custom_call.1} parent=1 // pred_fallthru
      _
    // Predicated region
    $region6: #{tpu_custom_call.1} parent=1 // pred_check
      _
    $region7: #{tpu_custom_call.1} parent=1 // pred_check_branch
      %23 = sbr.rel (0) target = $region9
    $region8: #{tpu_custom_call.1} parent=1 // pred_region
      %s25 = ssub.s32 1024, 1024
      %26 = vsyncadd [#allocation6], %s25
      %s27 = sshll.u32 [#allocation5], 4
      %s28 = int_to_ptr.vmem [resolvable:$true] %s27
      %33 = dma.hbm_to_vmem [thread:$0]  %s1, 1024, %s28, [#allocation6], 128, 128, 8
    $region9: #{tpu_custom_call.1} parent=1 // pred_fallthru
      _
    // Predicated region
    $region10: #{tpu_custom_call.1} parent=1 // pred_check
      _
    $region11: #{tpu_custom_call.1} parent=1 // pred_check_branch
      %35 = sbr.rel (0) target = $region13
    $region12: #{tpu_custom_call.1} parent=1 // pred_region
      %36 = dma.done [#allocation3], 256
    $region13: #{tpu_custom_call.1} parent=1 // pred_fallthru
      _
    // Predicated region
    $region14: #{tpu_custom_call.1} parent=1 // pred_check
      _
    $region15: #{tpu_custom_call.1} parent=1 // pred_check_branch
      %38 = sbr.rel (0) target = $region17
    $region16: #{tpu_custom_call.1} parent=1 // pred_region
      %39 = dma.done [#allocation6], 1024
    $region17: #{tpu_custom_call.1} parent=1 // pred_fallthru
      _
    %v40 = vld [vmem:[#allocation2] sm:$0xff]
    %v41 = vld [vmem:[#allocation2 + $0x8] sm:$0xff]
    %v42 = vld [vmem:[#allocation5] sm:$0xff]
    %v43 = vld [vmem:[#allocation5 + $0x8] sm:$0xff]
    %v44 = vld [vmem:[#allocation5 + $0x10] sm:$0xff]
    %v45 = vld [vmem:[#allocation5 + $0x18] sm:$0xff]
    %v46 = vld [vmem:[#allocation5 + $0x20] sm:$0xff]
    %v47 = vld [vmem:[#allocation5 + $0x28] sm:$0xff]
    %v48 = vld [vmem:[#allocation5 + $0x30] sm:$0xff]
    %v49 = vld [vmem:[#allocation5 + $0x38] sm:$0xff]
    %vm50 = vcmask 523264
    %v52 = vsel %vm50, %v40, 0
    %v55 = vsel %vm50, %v41, 0
    %57 = vmatprep.subr.mxu0 0.0
    %58 = vmatpush1.msra.mxu0 0.0
    %59 = vmatprep.subr.mxu0 0.0
    %60 = vmatpush1.msra.mxu0 0.0
    %61 = vmatprep.subr.mxu0 0.0
    %62 = vmatpush1.msra.mxu0 0.0
    %63 = vmatprep.subr.mxu0 0.0
    %64 = vmatpush1.msra.mxu0 0.0
    %65 = vmatprep.subr.mxu0 0.0
    %66 = vmatpush1.msra.mxu0 0.0
    %67 = vmatprep.subr.mxu0 0.0
    %68 = vmatpush1.msra.mxu0 0.0
    %69 = vmatprep.subr.mxu0 0.0
    %70 = vmatpush1.msra.mxu0 0.0
    %71 = vmatprep.subr.mxu0 0.0
    %72 = vmatpush1.msra.mxu0 0.0
    %73 = vmatprep.subr.mxu0 0.0
    %74 = vmatpush1.msra.mxu0 %v49
    %75 = vmatprep.subr.mxu0 0.0
    %76 = vmatpush1.msra.mxu0 %v48
    %77 = vmatprep.subr.mxu0 0.0
    %78 = vmatpush1.msra.mxu0 %v47
    %79 = vmatprep.subr.mxu0 0.0
    %80 = vmatpush1.msra.mxu0 %v46
    %81 = vmatprep.subr.mxu0 0.0
    %82 = vmatpush1.msra.mxu0 %v45
    %83 = vmatprep.subr.mxu0 0.0
    %84 = vmatpush1.msra.mxu0 %v44
    %85 = vmatprep.subr.mxu0 0.0
    %86 = vmatpush1.msra.mxu0 %v43
    %87 = vmatprep.subr.mxu0 0.0
    %88 = vmatpush1.msra.mxu0 %v42
    %89 = vmatprep.subr.mxu0 0.0
    %90 = vmatpush2.msra.mxu0 0.0
    %91 = vmatprep.subr.mxu0 0.0
    %92 = vmatpush2.msra.mxu0 0.0
    %93 = vmatprep.subr.mxu0 0.0
    %94 = vmatpush2.msra.mxu0 0.0
    %95 = vmatprep.subr.mxu0 0.0
    %96 = vmatpush2.msra.mxu0 0.0
    %97 = vmatprep.subr.mxu0 0.0
    %98 = vmatpush2.msra.mxu0 0.0
    %99 = vmatprep.subr.mxu0 0.0
    %100 = vmatpush2.msra.mxu0 0.0
    %101 = vmatprep.subr.mxu0 0.0
    %102 = vmatpush2.msra.mxu0 0.0
    %103 = vmatprep.subr.mxu0 0.0
    %104 = vmatpush2.msra.mxu0 0.0
    %105 = vmatprep.subr.mxu0 0.0
    %106 = vmatpush2.msra.mxu0 0.0
    %107 = vmatprep.subr.mxu0 0.0
    %108 = vmatpush2.msra.mxu0 0.0
    %109 = vmatprep.subr.mxu0 0.0
    %110 = vmatpush2.msra.mxu0 0.0
    %111 = vmatprep.subr.mxu0 0.0
    %112 = vmatpush2.msra.mxu0 0.0
    %113 = vmatprep.subr.mxu0 0.0
    %114 = vmatpush2.msra.mxu0 0.0
    %115 = vmatprep.subr.mxu0 0.0
    %116 = vmatpush2.msra.mxu0 0.0
    %117 = vmatprep.subr.mxu0 0.0
    %118 = vmatpush2.msra.mxu0 0.0
    %119 = vmatprep.subr.mxu0 0.0
    %120 = vmatpush2.msra.mxu0 0.0
    %121 = vmatprep.mubr.f32.mxu0 0.0
    %122 = vmatmul.mubr.f32.gmra.mxu0 %v52
    %v123 = vpop.f32.mrf.mxu0
    %v124 = vadd.f32 0.0, %v123
    %v125 = vpop.f32.mrf.mxu0
    %126 = vmatprep.mubr.f32.mxu0 0.0
    %127 = vmatmul.mubr.f32.gmra.mxu0 %v55
    %v128 = vpop.f32.mrf.mxu0
    %v129 = vadd.f32 0.0, %v128
    %v130 = vpop.f32.mrf.mxu0
    %131 = vdwg.mxu0
    %132 = vst [vmem:[#allocation7] sm:$0xff] %v124
    %133 = vst [vmem:[#allocation7 + $0x8] sm:$0xff] %v129
    // Predicated region
    $region18: #{tpu_custom_call.1} parent=1 // pred_check
      _
    $region19: #{tpu_custom_call.1} parent=1 // pred_check_branch
      %135 = sbr.rel (0) target = $region21
    $region20: #{tpu_custom_call.1} parent=1 // pred_region
      %s137 = ssub.s32 256, 256
      %138 = vsyncadd [#allocation4], %s137
      %s139 = sshll.u32 [#allocation7], 4
      %s140 = int_to_ptr.vmem [resolvable:$true] %s139
      %145 = dma.vmem_to_hbm [thread:$0]  %s140, 256, %s2, [#allocation4], 128, 128, 8
    $region21: #{tpu_custom_call.1} parent=1 // pred_fallthru
      _
    // Predicated region
    $region22: #{tpu_custom_call.1} parent=1 // pred_check
      _
    $region23: #{tpu_custom_call.1} parent=1 // pred_check_branch
      %147 = sbr.rel (0) target = $region25
    $region24: #{tpu_custom_call.1} parent=1 // pred_region
      %148 = dma.done [#allocation4], 256
    $region25: #{tpu_custom_call.1} parent=1 // pred_fallthru
      _
    %149 = vsyncpa [#allocation3], 1
    %150 = vsyncpa [#allocation6], 1
    %151 = vsyncpa [#allocation4], 1

</llo_original>
